<compile_context>
chip_gen: v5e
topology: v5e:2x2
jax: 0.10.0
libtpu: 0.0.40
codegen_flags: <defaults>
</compile_context>

<pallas_src>
import functools
import math

import jax
import jax.numpy as jnp
from jax import lax
from jax.experimental import pallas as pl
from jax.experimental.pallas import tpu as pltpu


def _attention_kernel(q_ref, c_ref, wq_ref, bq_ref, wo_ref, bo_ref, o_ref,
                      acc_ref, *, head_dim):
    """One grid step = (one batch element, one q-tile, one head).

    q_ref  : (1, TQ, E)      query tile (resident across the head axis)
    c_ref  : (1, 1, Lk, D)   this head's context slice (k == v)
    wq_ref : (1, E, D)       q_proj weight slice for this head, (in, out) layout
    bq_ref : (1, 1, D)       q_proj bias slice
    wo_ref : (1, D, Eo)      out_proj weight slice for this head, (in, out), padded
    bo_ref : (1, Eo)         out_proj bias (padded)
    o_ref  : (1, TQ, Eo)     output tile (written on the last head)
    acc_ref: (TQ, Eo) f32    VMEM accumulator across heads
    """
    h = pl.program_id(2)

    @pl.when(h == 0)
    def _init():
        acc_ref[...] = jnp.zeros_like(acc_ref)

    query = q_ref[0]                      # (TQ, E)
    kv = c_ref[0, 0]                      # (Lk, D)
    scale = 1.0 / math.sqrt(head_dim)

    # Per-head q projection (MXU); scale folded into q (== scaling the scores).
    q_h = (jnp.dot(query, wq_ref[0], preferred_element_type=jnp.float32)
           + bq_ref[0]) * scale                                     # (TQ, D) f32

    # Scores: contract last dims directly -- no materialized K transpose.
    s = lax.dot_general(q_h.astype(kv.dtype), kv,
                        dimension_numbers=(((1,), (1,)), ((), ())),
                        preferred_element_type=jnp.float32)         # (TQ, Lk) f32

    # Softmax in f32; normalize after PV: one reciprocal per row, on the EUP.
    m = jnp.max(s, axis=-1, keepdims=True)
    p = jnp.exp(s - m)
    l = jnp.sum(p, axis=-1, keepdims=True)                          # (TQ, 1)
    pv = jnp.dot(p.astype(kv.dtype), kv,
                 preferred_element_type=jnp.float32)                # (TQ, D)
    o_h = pv * pl.reciprocal(l, approx=True)

    # This head's contribution to out_proj, accumulated over the head grid axis
    # (this IS the module's "transpose + view + out_proj", no concat needed).
    acc_ref[...] += jnp.dot(o_h.astype(wo_ref.dtype), wo_ref[0],
                            preferred_element_type=jnp.float32)     # (TQ, Eo)

    @pl.when(h == pl.num_programs(2) - 1)
    def _finalize():
        o_ref[0] = (acc_ref[...] + bo_ref[...]).astype(o_ref.dtype)


def _pick_q_tile(lq):
    # Prefer 256-wide tiles (v6e MXU), fall back to smaller multiples of 8;
    # if nothing divides Lq, use the full (untiled) length.
    for t in (256, 128, 64, 32, 16, 8):
        if lq % t == 0:
            return t
    return lq


def efficient_attention(query, context, wq, bq, wo, bo, *, num_heads, q_tile=None):
    """query: (B, Lq, E), context: (B, Lk, E).
       wq/wo: (E, E) in PyTorch (out, in) layout; bq/bo: (E,)."""
    B, Lq, E = query.shape
    Bc, Lk, Ec = context.shape
    assert Bc == B and Ec == E
    assert E % num_heads == 0, "embed_dim must be divisible by num_heads"
    H = num_heads
    D = E // H

    tq = q_tile if q_tile is not None else _pick_q_tile(Lq)
    assert Lq % tq == 0
    nq = Lq // tq

    # Lane-dense output: pad out_proj's output dim to a multiple of 128.
    Eo = ((E + 127) // 128) * 128

    # ---- layout plumbing (plain XLA ops, outside the kernel) ----
    wq_h = wq.T.reshape(E, H, D).transpose(1, 0, 2)            # (H, E, D)
    bq_h = bq.reshape(H, 1, D)                                 # (H, 1, D)
    wo_h = wo.T.reshape(H, D, E)                               # (H, D, E)
    bo_p = bo.reshape(1, E)
    if Eo != E:
        wo_h = jnp.pad(wo_h, ((0, 0), (0, 0), (0, Eo - E)))
        bo_p = jnp.pad(bo_p, ((0, 0), (0, Eo - E)))
    # Head-major context so each head reads one contiguous (Lk, D) block.
    ctx_h = context.reshape(B, Lk, H, D).transpose(0, 2, 1, 3)  # (B, H, Lk, D)

    kernel = functools.partial(_attention_kernel, head_dim=D)

    out = pl.pallas_call(
        kernel,
        out_shape=jax.ShapeDtypeStruct((B, Lq, Eo), query.dtype),
        grid_spec=pltpu.PrefetchScalarGridSpec(
            num_scalar_prefetch=0,
            grid=(B, nq, H),                      # head axis = innermost reduction
            in_specs=[
                pl.BlockSpec((1, tq, E), lambda b, i, h: (b, i, 0)),
                pl.BlockSpec((1, 1, Lk, D), lambda b, i, h: (b, h, 0, 0)),
                pl.BlockSpec((1, E, D), lambda b, i, h: (h, 0, 0)),
                pl.BlockSpec((1, 1, D), lambda b, i, h: (h, 0, 0)),
                pl.BlockSpec((1, D, Eo), lambda b, i, h: (h, 0, 0)),
                pl.BlockSpec((1, Eo), lambda b, i, h: (0, 0)),
            ],
            out_specs=pl.BlockSpec((1, tq, Eo), lambda b, i, h: (b, i, 0)),
            scratch_shapes=[pltpu.VMEM((tq, Eo), jnp.float32)],
        ),
        compiler_params=pltpu.CompilerParams(
            dimension_semantics=("parallel", "parallel", "arbitrary")),
    )(query, ctx_h, wq_h, bq_h, wo_h, bo_p)

    return out[:, :, :E] if Eo != E else out


def _reference(query, context, wq, bq, wo, bo, *, num_heads):
    """Pure-JAX reference mirroring the PyTorch forward."""
    B, Lq, E = query.shape
    _, Lk, _ = context.shape
    D = E // num_heads
    q = query @ wq.T + bq
    q = q.reshape(B, Lq, num_heads, D).transpose(0, 2, 1, 3)
    k = context.reshape(B, Lk, num_heads, D).transpose(0, 2, 1, 3)
    v = k
    s = jnp.einsum("bhqd,bhkd->bhqk", q, k) / math.sqrt(D)
    w = jax.nn.softmax(s, axis=-1)
    o = jnp.einsum("bhqk,bhkd->bhqd", w, v)
    o = o.transpose(0, 2, 1, 3).reshape(B, Lq, E)
    return o @ wo.T + bo


if __name__ == "__main__":
    B, Lq, Lk = 2, 8, 8
    E, H = 32, 4

    key = jax.random.PRNGKey(0)
    k1, k2, k3, k4, k5, k6 = jax.random.split(key, 6)

    query = jax.random.normal(k1, (B, Lq, E), dtype=jnp.float32)
    context = jax.random.normal(k2, (B, Lk, E), dtype=jnp.float32)

    # "nn.Linear"-style parameters (PyTorch layout: (out, in)).
    bound = 1.0 / math.sqrt(E)
    wq = jax.random.uniform(k3, (E, E), minval=-bound, maxval=bound, dtype=jnp.float32)
    bq = jax.random.uniform(k4, (E,), minval=-bound, maxval=bound, dtype=jnp.float32)
    wo = jax.random.uniform(k5, (E, E), minval=-bound, maxval=bound, dtype=jnp.float32)
    bo = jax.random.uniform(k6, (E,), minval=-bound, maxval=bound, dtype=jnp.float32)

    out = efficient_attention(query, context, wq, bq, wo, bo, num_heads=H)
    out = jax.block_until_ready(out)

    ref = _reference(query, context, wq, bq, wo, bo, num_heads=H)
    assert out.shape == (B, Lq, E)
    # Tolerance loosened vs pure-f32 because the kernel uses the approximate EUP
    # reciprocal for the softmax denominator (per perf review); structural bugs
    # would show up as O(1) errors, far above this.
    assert jnp.allclose(out, ref, atol=2e-2, rtol=2e-2), "mismatch vs reference"

    print("KERNEL_OK")
</pallas_src>

<mosaic_0001>
module attributes {stable_mosaic.version = 11 : i64} {
  func.func @_attention_kernel(%arg0: i32, %arg1: i32, %arg2: i32, %arg3: memref<1x8x32xf32, #tpu.memory_space<vmem>>, %arg4: memref<1x1x8x8xf32, #tpu.memory_space<vmem>>, %arg5: memref<1x32x8xf32, #tpu.memory_space<vmem>>, %arg6: memref<1x1x8xf32, #tpu.memory_space<vmem>>, %arg7: memref<1x8x128xf32, #tpu.memory_space<vmem>>, %arg8: memref<1x128xf32, #tpu.memory_space<vmem>>, %arg9: memref<1x8x128xf32, #tpu.memory_space<vmem>>, %arg10: memref<8x128xf32, #tpu.memory_space<vmem>>) attributes {dimension_semantics = [#tpu.dimension_semantics<parallel>, #tpu.dimension_semantics<parallel>, #tpu.dimension_semantics<arbitrary>], iteration_bounds = array<i64: 2, 1, 4>, scalar_prefetch = 0 : i64, scratch_operands = 1 : i64, tpu.core_type = #tpu.core_type<tc>, window_params = [{transform_indices = @transform_0, window_bounds = array<i64: 1, 8, 32>}, {transform_indices = @transform_1, window_bounds = array<i64: 1, 1, 8, 8>}, {transform_indices = @transform_2, window_bounds = array<i64: 1, 32, 8>}, {transform_indices = @transform_3, window_bounds = array<i64: 1, 1, 8>}, {transform_indices = @transform_4, window_bounds = array<i64: 1, 8, 128>}, {pipeline_mode = #tpu.pipeline_mode<synchronous>, transform_indices = @transform_5, window_bounds = array<i64: 1, 128>}, {transform_indices = @transform_6, window_bounds = array<i64: 1, 8, 128>}]} {
    %c0_i32 = arith.constant 0 : i32
    %0 = arith.cmpi eq, %arg2, %c0_i32 : i32
    %1 = arith.extui %0 : i1 to i32
    %c0_i32_0 = arith.constant 0 : i32
    %2 = arith.cmpi ne, %1, %c0_i32_0 : i32
    scf.if %2 {
      %cst_27 = arith.constant 0.000000e+00 : f32
      %37 = vector.broadcast %cst_27 : f32 to vector<8x128xf32>
      %c0_28 = arith.constant 0 : index
      %c0_29 = arith.constant 0 : index
      %38 = vector.load %arg10[%c0_28, %c0_29] : memref<8x128xf32, #tpu.memory_space<vmem>>, vector<8x128xf32>
      tpu.vector_store %arg10[%c0_28, %c0_29], %37 {strides = array<i32>} : memref<8x128xf32, #tpu.memory_space<vmem>>, vector<8x128xf32>,
    } else {
    }
    %c0 = arith.constant 0 : index
    %c0_1 = arith.constant 0 : index
    %c0_2 = arith.constant 0 : index
    %3 = vector.load %arg3[%c0, %c0_1, %c0_2] : memref<1x8x32xf32, #tpu.memory_space<vmem>>, vector<1x8x32xf32>
    %4 = vector.shape_cast %3 : vector<1x8x32xf32> to vector<8x32xf32>
    %c0_3 = arith.constant 0 : index
    %c0_4 = arith.constant 0 : index
    %c0_5 = arith.constant 0 : index
    %c0_6 = arith.constant 0 : index
    %5 = vector.load %arg4[%c0_3, %c0_4, %c0_5, %c0_6] : memref<1x1x8x8xf32, #tpu.memory_space<vmem>>, vector<1x1x8x8xf32>
    %6 = vector.shape_cast %5 : vector<1x1x8x8xf32> to vector<8x8xf32>
    %c0_7 = arith.constant 0 : index
    %c0_8 = arith.constant 0 : index
    %c0_9 = arith.constant 0 : index
    %7 = vector.load %arg5[%c0_7, %c0_8, %c0_9] : memref<1x32x8xf32, #tpu.memory_space<vmem>>, vector<1x32x8xf32>
    %8 = vector.shape_cast %7 : vector<1x32x8xf32> to vector<32x8xf32>
    %cst = arith.constant dense<0.000000e+00> : vector<8x8xf32>
    %9 = tpu.matmul %4, %8, %cst {dimension_numbers = #tpu.dot_dimension_numbers<[1], [0], [0], [1], [0, 0, 1, 1], [], []>} : vector<8x32xf32>, vector<32x8xf32>, vector<8x8xf32> -> vector<8x8xf32>
    %c0_10 = arith.constant 0 : index
    %c0_11 = arith.constant 0 : index
    %c0_12 = arith.constant 0 : index
    %10 = vector.load %arg6[%c0_10, %c0_11, %c0_12] : memref<1x1x8xf32, #tpu.memory_space<vmem>>, vector<1x1x8xf32>
    %11 = vector.shape_cast %10 : vector<1x1x8xf32> to vector<1x8xf32>
    %12 = vector.broadcast %11 : vector<1x8xf32> to vector<8x8xf32>
    %13 = arith.addf %9, %12 : vector<8x8xf32>
    %cst_13 = arith.constant 0.353553385 : f32
    %14 = vector.broadcast %cst_13 : f32 to vector<8x8xf32>
    %15 = arith.mulf %13, %14 : vector<8x8xf32>
    %cst_14 = arith.constant dense<0.000000e+00> : vector<8x8xf32>
    %16 = tpu.matmul %15, %6, %cst_14 {dimension_numbers = #tpu.dot_dimension_numbers<[1], [1], [0], [0], [0, 0, 1, 0], [], []>} : vector<8x8xf32>, vector<8x8xf32>, vector<8x8xf32> -> vector<8x8xf32>
    %cst_15 = arith.constant dense<0xFF800000> : vector<8xf32>
    %17 = vector.multi_reduction <maximumf>, %16, %cst_15 [1] : vector<8x8xf32> to vector<8xf32>
    %18 = vector.shape_cast %17 : vector<8xf32> to vector<8x1xf32>
    %19 = vector.broadcast %18 : vector<8x1xf32> to vector<8x8xf32>
    %20 = arith.subf %16, %19 : vector<8x8xf32>
    %21 = math.exp %20 : vector<8x8xf32>
    %cst_16 = arith.constant dense<0.000000e+00> : vector<8xf32>
    %22 = vector.multi_reduction <add>, %21, %cst_16 [1] : vector<8x8xf32> to vector<8xf32>
    %23 = vector.shape_cast %22 : vector<8xf32> to vector<8x1xf32>
    %cst_17 = arith.constant dense<0.000000e+00> : vector<8x8xf32>
    %24 = tpu.matmul %21, %6, %cst_17 {dimension_numbers = #tpu.dot_dimension_numbers<[1], [0], [0], [1], [0, 0, 1, 1], [], []>} : vector<8x8xf32>, vector<8x8xf32>, vector<8x8xf32> -> vector<8x8xf32>
    %25 = tpu.reciprocal %23 {approx = true} : vector<8x1xf32> -> vector<8x1xf32>
    %26 = vector.broadcast %25 : vector<8x1xf32> to vector<8x8xf32>
    %27 = arith.mulf %24, %26 : vector<8x8xf32>
    %c0_18 = arith.constant 0 : index
    %c0_19 = arith.constant 0 : index
    %28 = vector.load %arg10[%c0_18, %c0_19] : memref<8x128xf32, #tpu.memory_space<vmem>>, vector<8x128xf32>
    %c0_20 = arith.constant 0 : index
    %c0_21 = arith.constant 0 : index
    %c0_22 = arith.constant 0 : index
    %29 = vector.load %arg7[%c0_20, %c0_21, %c0_22] : memref<1x8x128xf32, #tpu.memory_space<vmem>>, vector<1x8x128xf32>
    %30 = vector.shape_cast %29 : vector<1x8x128xf32> to vector<8x128xf32>
    %cst_23 = arith.constant dense<0.000000e+00> : vector<8x128xf32>
    %31 = tpu.matmul %27, %30, %cst_23 {dimension_numbers = #tpu.dot_dimension_numbers<[1], [0], [0], [1], [0, 0, 1, 1], [], []>} : vector<8x8xf32>, vector<8x128xf32>, vector<8x128xf32> -> vector<8x128xf32>
    %32 = arith.addf %28, %31 : vector<8x128xf32>
    %c0_24 = arith.constant 0 : index
    %c0_25 = arith.constant 0 : index
    %33 = vector.load %arg10[%c0_24, %c0_25] : memref<8x128xf32, #tpu.memory_space<vmem>>, vector<8x128xf32>
    tpu.vector_store %arg10[%c0_24, %c0_25], %32 {strides = array<i32>} : memref<8x128xf32, #tpu.memory_space<vmem>>, vector<8x128xf32>,
    %c3_i32 = arith.constant 3 : i32
    %34 = arith.cmpi eq, %arg2, %c3_i32 : i32
    %35 = arith.extui %34 : i1 to i32
    %c0_i32_26 = arith.constant 0 : i32
    %36 = arith.cmpi ne, %35, %c0_i32_26 : i32
    scf.if %36 {
      %c0_27 = arith.constant 0 : index
      %c0_28 = arith.constant 0 : index
      %37 = vector.load %arg10[%c0_27, %c0_28] : memref<8x128xf32, #tpu.memory_space<vmem>>, vector<8x128xf32>
      %c0_29 = arith.constant 0 : index
      %c0_30 = arith.constant 0 : index
      %38 = vector.load %arg8[%c0_29, %c0_30] : memref<1x128xf32, #tpu.memory_space<vmem>>, vector<1x128xf32>
      %39 = vector.broadcast %38 : vector<1x128xf32> to vector<8x128xf32>
      %40 = arith.addf %37, %39 : vector<8x128xf32>
      %c0_31 = arith.constant 0 : index
      %c0_32 = arith.constant 0 : index
      %c0_33 = arith.constant 0 : index
      %41 = vector.load %arg9[%c0_31, %c0_32, %c0_33] : memref<1x8x128xf32, #tpu.memory_space<vmem>>, vector<1x8x128xf32>
      %42 = vector.shape_cast %41 : vector<1x8x128xf32> to vector<8x128xf32>
      %43 = vector.shape_cast %40 : vector<8x128xf32> to vector<1x8x128xf32>
      tpu.vector_store %arg9[%c0_31, %c0_32, %c0_33], %43 {strides = array<i32>} : memref<1x8x128xf32, #tpu.memory_space<vmem>>, vector<1x8x128xf32>,
    } else {
    }
    return
  }
  func.func @transform_0(%arg0: i32, %arg1: i32, %arg2: i32) -> (i32, i32, i32) {
    %c0_i32 = arith.constant 0 : i32
    %c0_i32_0 = arith.constant 0 : i32
    return %arg0, %arg1, %c0_i32 : i32, i32, i32
  }
  func.func @transform_1(%arg0: i32, %arg1: i32, %arg2: i32) -> (i32, i32, i32, i32) {
    %c0_i32 = arith.constant 0 : i32
    %c0_i32_0 = arith.constant 0 : i32
    %c0_i32_1 = arith.constant 0 : i32
    return %arg0, %arg2, %c0_i32, %c0_i32_0 : i32, i32, i32, i32
  }
  func.func @transform_2(%arg0: i32, %arg1: i32, %arg2: i32) -> (i32, i32, i32) {
    %c0_i32 = arith.constant 0 : i32
    %c0_i32_0 = arith.constant 0 : i32
    %c0_i32_1 = arith.constant 0 : i32
    return %arg2, %c0_i32, %c0_i32_0 : i32, i32, i32
  }
  func.func @transform_3(%arg0: i32, %arg1: i32, %arg2: i32) -> (i32, i32, i32) {
    %c0_i32 = arith.constant 0 : i32
    %c0_i32_0 = arith.constant 0 : i32
    %c0_i32_1 = arith.constant 0 : i32
    return %arg2, %c0_i32, %c0_i32_0 : i32, i32, i32
  }
  func.func @transform_4(%arg0: i32, %arg1: i32, %arg2: i32) -> (i32, i32, i32) {
    %c0_i32 = arith.constant 0 : i32
    %c0_i32_0 = arith.constant 0 : i32
    %c0_i32_1 = arith.constant 0 : i32
    return %arg2, %c0_i32, %c0_i32_0 : i32, i32, i32
  }
  func.func @transform_5(%arg0: i32, %arg1: i32, %arg2: i32) -> (i32, i32) {
    %c0_i32 = arith.constant 0 : i32
    %c0_i32_0 = arith.constant 0 : i32
    %c0_i32_1 = arith.constant 0 : i32
    return %c0_i32, %c0_i32_0 : i32, i32
  }
  func.func @transform_6(%arg0: i32, %arg1: i32, %arg2: i32) -> (i32, i32, i32) {
    %c0_i32 = arith.constant 0 : i32
    %c0_i32_0 = arith.constant 0 : i32
    return %arg0, %arg1, %c0_i32 : i32, i32, i32
  }
}

</mosaic_0001>

<llo_original>
// kernel: tpu_custom_call.1
$region0: #{tpu_custom_call.1}
  #allocation0 [shape = 'u32[]', space=smem, size = 0x4, offset = 0x4, fixed_abs, tag = 'smem constant byte address 0x4 - core index']
  #allocation1 [shape = 'u32[72,128]{1,0:T(1,128)}', space=vmem, size = 0x9000, scoped, tag = 'internal scratch']
  #allocation2 [shape = 'f32[8,128]{1,0:T(8,128)}', space=vmem, size = 0x1000, scoped, tag = 'scratch operand']
  %s0 = inlined_call_operand.vmem [shape: f32[2,8,32], index: 0, kind: input, shape index: {}]
  %s1 = inlined_call_operand.vmem [shape: f32[2,4,8,8], index: 1, kind: input, shape index: {}]
  %s2 = inlined_call_operand.vmem [shape: f32[4,32,8], index: 2, kind: input, shape index: {}]
  %s3 = inlined_call_operand.vmem [shape: f32[4,1,8], index: 3, kind: input, shape index: {}]
  %s4 = inlined_call_operand.vmem [shape: f32[4,8,128], index: 4, kind: input, shape index: {}]
  %s5 = inlined_call_operand.vmem [shape: f32[1,128], index: 5, kind: input, shape index: {}]
  %s6 = inlined_call_operand.hbm [shape: f32[2,8,128], index: 6, kind: output, shape index: {}]
  %s7 = sld [smem:[#allocation0]]
  $region65: #{tpu_custom_call.1} parent=0
    _
  %s9 = ssub.s32 1, %s7
  %s10 = scalar_select 0, %s9, %s7
  $region1: #{tpu_custom_call.1} parent=0
    #allocation3 [shape = 'u8[8192]{0}', space=vmem, size = 0x2000, scoped, tag = 'output window, operand 0']
    #allocation4 [shape = 's32[2]{0}', space=sflag, size = 0x8, scoped, tag = 'scoped memory for tpu_custom_call.1']
    %11 = vsyncpa [#allocation4], 0
    %s12 = scalar_lea.sflag [#allocation4], 1
    %13 = vsyncpa %s12, 0
    loop: start=0, step=1, limit=10
    $region2: #{tpu_custom_call.1} parent=1 // loop_pre_header
      _
    $region3: #{tpu_custom_call.1} parent=1 // loop_header
      %s15 = sphi 0, %s19
      %p16 = scmp.ge.s32.totalorder %s15, 10
      %s22 = sphi 0, %s41
      %s23 = sphi 0, %s37
      %s24 = sphi 0, %s33
      %s25 = sphi 0, %s22
      %s26 = sphi 0, %s23
      %s27 = sphi 0, %s24
      %s28 = sphi 0, %s25
      %s29 = sphi 0, %s26
      %s30 = sphi 0, %s27
      %s46 = sphi 0, %s48
      %s49 = sphi 0, %s46
      %s50 = sphi 0, %s49
      %s66 = sphi 0, %s50
      %s74 = sphi 0, %s76
      %s77 = sphi 0, %s74
      %s78 = sphi 0, %s77
      %s94 = sphi 0, %s78
      %s100 = sphi 0, %s102
      %s103 = sphi 0, %s100
      %s104 = sphi 0, %s103
      %s120 = sphi 0, %s104
      %s126 = sphi 0, %s128
      %s129 = sphi 0, %s126
      %s130 = sphi 0, %s129
      %s146 = sphi 0, %s130
      %s152 = sphi 0, %s154
      %s155 = sphi 0, %s152
      %s156 = sphi 0, %s155
      %s172 = sphi 0, %s156
      %s176 = sphi 0, %s176
      %s178 = sphi 0, %s176
      %s179 = sphi 0, %s178
      %s193 = sphi 0, %s179
      %s201 = sphi 0, %s203
      %s204 = sphi 0, %s201
      %s205 = sphi 0, %s204
      %s221 = sphi 0, %s205
    $region4: #{tpu_custom_call.1} parent=1 // loop_header_branch
      %18 = sbr.rel (%p16) target = $region8
    $region5: #{tpu_custom_call.1} parent=1 // loop_body
      %s20 = ssub.s32 %s15, 1
      %s21 = ssub.s32 %s15, 2
      %s31 = sadd.s32 1, %s24
      %p32 = scmp.ge.s32.totalorder %s31, 4
      %s33 = scalar_select %p32, 0, %s31
      %s34 = sadd.s32 1, %s23
      %s35 = scalar_select %p32, %s34, %s23
      %p36 = scmp.ge.s32.totalorder %s35, 1
      %s37 = scalar_select %p36, 0, %s35
      %s38 = sadd.s32 1, %s22
      %s39 = scalar_select %p36, %s38, %s22
      %p40 = scmp.ge.s32.totalorder %s39, 2
      %s41 = scalar_select %p40, 0, %s39
      %s42 = ssub.s32 %s22, %s41
      %s43 = ssub.s32 %s23, %s37
      %s44 = sor.u32 %s42, %s43
      %p45 = scmp.eq.s32.totalorder %s44, 0
      %s47 = sadd.s32 %s46, 1
      %s48 = scalar_select %p45, %s46, %s47
      %p51 = pneg %p45
      %p52 = scmp.eq.s32.totalorder %s15, 7
      %p53 = por %p51, %p52
      %p54 = scmp.ne.s32.totalorder %s46, %s49
      %p55 = scmp.eq.s32.totalorder %s15, 0
      %p56 = por %p54, %p55
      %p57 = scmp.ne.s32.totalorder %s46, %s49
      %p58 = scmp.eq.s32.totalorder %s20, 7
      %p59 = por %p57, %p58
      %p60 = scmp.ne.s32.totalorder %s49, %s50
      %p61 = scmp.eq.s32.totalorder %s20, 0
      %p62 = por %p60, %p61
      %p63 = scmp.ne.s32.totalorder %s49, %s50
      %p64 = scmp.eq.s32.totalorder %s21, 7
      %p65 = por %p63, %p64
      %p67 = scmp.ne.s32.totalorder %s50, %s66
      %p68 = scmp.eq.s32.totalorder %s21, 0
      %p69 = por %p67, %p68
      %s70 = ssub.s32 %s22, %s41
      %s71 = ssub.s32 %s24, %s33
      %s72 = sor.u32 %s70, %s71
      %p73 = scmp.eq.s32.totalorder %s72, 0
      %s75 = sadd.s32 %s74, 1
      %s76 = scalar_select %p73, %s74, %s75
      %p79 = pneg %p73
      %p80 = scmp.eq.s32.totalorder %s15, 7
      %p81 = por %p79, %p80
      %p82 = scmp.ne.s32.totalorder %s74, %s77
      %p83 = scmp.eq.s32.totalorder %s15, 0
      %p84 = por %p82, %p83
      %p85 = scmp.ne.s32.totalorder %s74, %s77
      %p86 = scmp.eq.s32.totalorder %s20, 7
      %p87 = por %p85, %p86
      %p88 = scmp.ne.s32.totalorder %s77, %s78
      %p89 = scmp.eq.s32.totalorder %s20, 0
      %p90 = por %p88, %p89
      %p91 = scmp.ne.s32.totalorder %s77, %s78
      %p92 = scmp.eq.s32.totalorder %s21, 7
      %p93 = por %p91, %p92
      %p95 = scmp.ne.s32.totalorder %s78, %s94
      %p96 = scmp.eq.s32.totalorder %s21, 0
      %p97 = por %p95, %p96
      %s98 = ssub.s32 %s24, %s33
      %p99 = scmp.eq.s32.totalorder %s98, 0
      %s101 = sadd.s32 %s100, 1
      %s102 = scalar_select %p99, %s100, %s101
      %p105 = pneg %p99
      %p106 = scmp.eq.s32.totalorder %s15, 7
      %p107 = por %p105, %p106
      %p108 = scmp.ne.s32.totalorder %s100, %s103
      %p109 = scmp.eq.s32.totalorder %s15, 0
      %p110 = por %p108, %p109
      %p111 = scmp.ne.s32.totalorder %s100, %s103
      %p112 = scmp.eq.s32.totalorder %s20, 7
      %p113 = por %p111, %p112
      %p114 = scmp.ne.s32.totalorder %s103, %s104
      %p115 = scmp.eq.s32.totalorder %s20, 0
      %p116 = por %p114, %p115
      %p117 = scmp.ne.s32.totalorder %s103, %s104
      %p118 = scmp.eq.s32.totalorder %s21, 7
      %p119 = por %p117, %p118
      %p121 = scmp.ne.s32.totalorder %s104, %s120
      %p122 = scmp.eq.s32.totalorder %s21, 0
      %p123 = por %p121, %p122
      %s124 = ssub.s32 %s24, %s33
      %p125 = scmp.eq.s32.totalorder %s124, 0
      %s127 = sadd.s32 %s126, 1
      %s128 = scalar_select %p125, %s126, %s127
      %p131 = pneg %p125
      %p132 = scmp.eq.s32.totalorder %s15, 7
      %p133 = por %p131, %p132
      %p134 = scmp.ne.s32.totalorder %s126, %s129
      %p135 = scmp.eq.s32.totalorder %s15, 0
      %p136 = por %p134, %p135
      %p137 = scmp.ne.s32.totalorder %s126, %s129
      %p138 = scmp.eq.s32.totalorder %s20, 7
      %p139 = por %p137, %p138
      %p140 = scmp.ne.s32.totalorder %s129, %s130
      %p141 = scmp.eq.s32.totalorder %s20, 0
      %p142 = por %p140, %p141
      %p143 = scmp.ne.s32.totalorder %s129, %s130
      %p144 = scmp.eq.s32.totalorder %s21, 7
      %p145 = por %p143, %p144
      %p147 = scmp.ne.s32.totalorder %s130, %s146
      %p148 = scmp.eq.s32.totalorder %s21, 0
      %p149 = por %p147, %p148
      %s150 = ssub.s32 %s24, %s33
      %p151 = scmp.eq.s32.totalorder %s150, 0
      %s153 = sadd.s32 %s152, 1
      %s154 = scalar_select %p151, %s152, %s153
      %p157 = pneg %p151
      %p158 = scmp.eq.s32.totalorder %s15, 7
      %p159 = por %p157, %p158
      %p160 = scmp.ne.s32.totalorder %s152, %s155
      %p161 = scmp.eq.s32.totalorder %s15, 0
      %p162 = por %p160, %p161
      %p163 = scmp.ne.s32.totalorder %s152, %s155
      %p164 = scmp.eq.s32.totalorder %s20, 7
      %p165 = por %p163, %p164
      %p166 = scmp.ne.s32.totalorder %s155, %s156
      %p167 = scmp.eq.s32.totalorder %s20, 0
      %p168 = por %p166, %p167
      %p169 = scmp.ne.s32.totalorder %s155, %s156
      %p170 = scmp.eq.s32.totalorder %s21, 7
      %p171 = por %p169, %p170
      %p173 = scmp.ne.s32.totalorder %s156, %s172
      %p174 = scmp.eq.s32.totalorder %s21, 0
      %p175 = por %p173, %p174
      %s177 = sadd.s32 %s176, 1
      %p180 = scmp.eq.s32.totalorder %s15, 7
      %p181 = scmp.ne.s32.totalorder %s176, %s178
      %p182 = scmp.eq.s32.totalorder %s15, 0
      %p183 = por %p181, %p182
      %p184 = scmp.ne.s32.totalorder %s176, %s178
      %p185 = scmp.eq.s32.totalorder %s20, 7
      %p186 = por %p184, %p185
      %p187 = scmp.ne.s32.totalorder %s178, %s179
      %p188 = scmp.eq.s32.totalorder %s20, 0
      %p189 = por %p187, %p188
      %p190 = scmp.ne.s32.totalorder %s178, %s179
      %p191 = scmp.eq.s32.totalorder %s21, 7
      %p192 = por %p190, %p191
      %p194 = scmp.ne.s32.totalorder %s179, %s193
      %p195 = scmp.eq.s32.totalorder %s21, 0
      %p196 = por %p194, %p195
      %s197 = ssub.s32 %s22, %s41
      %s198 = ssub.s32 %s23, %s37
      %s199 = sor.u32 %s197, %s198
      %p200 = scmp.eq.s32.totalorder %s199, 0
      %s202 = sadd.s32 %s201, 1
      %s203 = scalar_select %p200, %s201, %s202
      %p206 = pneg %p200
      %p207 = scmp.eq.s32.totalorder %s15, 7
      %p208 = por %p206, %p207
      %p209 = scmp.ne.s32.totalorder %s201, %s204
      %p210 = scmp.eq.s32.totalorder %s15, 0
      %p211 = por %p209, %p210
      %p212 = scmp.ne.s32.totalorder %s201, %s204
      %p213 = scmp.eq.s32.totalorder %s20, 7
      %p214 = por %p212, %p213
      %p215 = scmp.ne.s32.totalorder %s204, %s205
      %p216 = scmp.eq.s32.totalorder %s20, 0
      %p217 = por %p215, %p216
      %p218 = scmp.ne.s32.totalorder %s204, %s205
      %p219 = scmp.eq.s32.totalorder %s21, 7
      %p220 = por %p218, %p219
      %p222 = scmp.ne.s32.totalorder %s205, %s221
      %p223 = scmp.eq.s32.totalorder %s21, 0
      %p224 = por %p222, %p223
      %p225 = scmp.le.s32.totalorder 1, %s15
      %p226 = scmp.lt.s32.totalorder %s15, 9
      %p227 = pnand %p225, %p226
      %p228 = pneg %p227
      // Predicated region
      $region9: #{tpu_custom_call.1} parent=5 // pred_check
        _
      $region10: #{tpu_custom_call.1} parent=5 // pred_check_branch
        %230 = sbr.rel (%p227) target = $region12
      $region11: #{tpu_custom_call.1} parent=5 // pred_region
        %s231 = ssub.s32 %s15, 1
        // Predicated region
        $region13: #{tpu_custom_call.1} parent=11 // pred_check
          %p232 = pneg %p189
        $region14: #{tpu_custom_call.1} parent=11 // pred_check_branch
          %234 = sbr.rel (%p232) target = $region16
        $region15: #{tpu_custom_call.1} parent=11 // pred_region
          _
        $region16: #{tpu_custom_call.1} parent=11 // pred_fallthru
          _
      $region12: #{tpu_custom_call.1} parent=5 // pred_fallthru
        _
      %p235 = scmp.lt.s32.totalorder %s15, 8
      // Predicated region
      $region17: #{tpu_custom_call.1} parent=5 // pred_check
        %p236 = pneg %p235
      $region18: #{tpu_custom_call.1} parent=5 // pred_check_branch
        %238 = sbr.rel (%p236) target = $region20
      $region19: #{tpu_custom_call.1} parent=5 // pred_region
        // Predicated region
        $region21: #{tpu_custom_call.1} parent=19 // pred_check
          %p239 = pneg %p56
        $region22: #{tpu_custom_call.1} parent=19 // pred_check_branch
          %241 = sbr.rel (%p239) target = $region24
        $region23: #{tpu_custom_call.1} parent=19 // pred_region
          %p242 = scmp.lt.s32.totalorder %s22, 1
          %s243 = scalar_select %p242, %s22, 1
          %p244 = scmp.lt.s32.totalorder %s23, 0
          %s245 = scalar_select %p244, %s23, 0
          %s246 = sadd.s32 %s245, %s243
          %s247 = smul.addr %s246, 8
          %s248 = scalar_lea.vmem %s0, %s247
        $region24: #{tpu_custom_call.1} parent=19 // pred_fallthru
          _
        // Predicated region
        $region25: #{tpu_custom_call.1} parent=19 // pred_check
          %p249 = pneg %p84
        $region26: #{tpu_custom_call.1} parent=19 // pred_check_branch
          %251 = sbr.rel (%p249) target = $region28
        $region27: #{tpu_custom_call.1} parent=19 // pred_region
          %p252 = scmp.lt.s32.totalorder %s22, 1
          %s253 = scalar_select %p252, %s22, 1
          %p254 = scmp.lt.s32.totalorder %s24, 3
          %s255 = scalar_select %p254, %s24, 3
          %s256 = smul.addr %s253, 4
          %s257 = sadd.s32 %s255, %s256
          %s258 = smul.addr %s257, 8
          %s259 = scalar_lea.vmem %s1, %s258
        $region28: #{tpu_custom_call.1} parent=19 // pred_fallthru
          _
        // Predicated region
        $region29: #{tpu_custom_call.1} parent=19 // pred_check
          %p260 = pneg %p110
        $region30: #{tpu_custom_call.1} parent=19 // pred_check_branch
          %262 = sbr.rel (%p260) target = $region32
        $region31: #{tpu_custom_call.1} parent=19 // pred_region
          %p263 = scmp.lt.s32.totalorder %s24, 3
          %s264 = scalar_select %p263, %s24, 3
          %s265 = smul.addr %s264, 4
          %s266 = smul.addr %s265, 8
          %s267 = scalar_lea.vmem %s2, %s266
        $region32: #{tpu_custom_call.1} parent=19 // pred_fallthru
          _
        // Predicated region
        $region33: #{tpu_custom_call.1} parent=19 // pred_check
          %p268 = pneg %p136
        $region34: #{tpu_custom_call.1} parent=19 // pred_check_branch
          %270 = sbr.rel (%p268) target = $region36
        $region35: #{tpu_custom_call.1} parent=19 // pred_region
          %p271 = scmp.lt.s32.totalorder %s24, 3
          %s272 = scalar_select %p271, %s24, 3
          %s273 = scalar_lea.vmem %s3, %s272
        $region36: #{tpu_custom_call.1} parent=19 // pred_fallthru
          _
        // Predicated region
        $region37: #{tpu_custom_call.1} parent=19 // pred_check
          %p274 = pneg %p162
        $region38: #{tpu_custom_call.1} parent=19 // pred_check_branch
          %276 = sbr.rel (%p274) target = $region40
        $region39: #{tpu_custom_call.1} parent=19 // pred_region
          %p277 = scmp.lt.s32.totalorder %s24, 3
          %s278 = scalar_select %p277, %s24, 3
          %s279 = smul.addr %s278, 8
          %s280 = scalar_lea.vmem %s4, %s279
        $region40: #{tpu_custom_call.1} parent=19 // pred_fallthru
          _
      $region20: #{tpu_custom_call.1} parent=5 // pred_fallthru
        _
      %p281 = scmp.le.s32.totalorder 1, %s15
      %p282 = scmp.lt.s32.totalorder %s15, 9
      %p283 = pnand %p281, %p282
      %p284 = pneg %p283
      // Predicated region
      $region41: #{tpu_custom_call.1} parent=5 // pred_check
        _
      $region42: #{tpu_custom_call.1} parent=5 // pred_check_branch
        %286 = sbr.rel (%p283) target = $region44
      $region43: #{tpu_custom_call.1} parent=5 // pred_region
        %s287 = ssub.s32 %s15, 1
        %p288 = scmp.lt.s32.totalorder %s25, 1
        %s289 = scalar_select %p288, %s25, 1
        %p290 = scmp.lt.s32.totalorder %s26, 0
        %s291 = scalar_select %p290, %s26, 0
        %s292 = sadd.s32 %s291, %s289
        %s293 = smul.addr %s292, 8
        %s294 = scalar_lea.vmem %s0, %s293
        %p295 = pneg %p62
        %p296 = pneg %p59
        %p297 = scmp.lt.s32.totalorder %s25, 1
        %s298 = scalar_select %p297, %s25, 1
        %p299 = scmp.lt.s32.totalorder %s27, 3
        %s300 = scalar_select %p299, %s27, 3
        %s301 = smul.addr %s298, 4
        %s302 = sadd.s32 %s300, %s301
        %s303 = smul.addr %s302, 8
        %s304 = scalar_lea.vmem %s1, %s303
        %p305 = pneg %p90
        %p306 = pneg %p87
        %p307 = scmp.lt.s32.totalorder %s27, 3
        %s308 = scalar_select %p307, %s27, 3
        %s309 = smul.addr %s308, 4
        %s310 = smul.addr %s309, 8
        %s311 = scalar_lea.vmem %s2, %s310
        %p312 = pneg %p116
        %p313 = pneg %p113
        %p314 = scmp.lt.s32.totalorder %s27, 3
        %s315 = scalar_select %p314, %s27, 3
        %s316 = scalar_lea.vmem %s3, %s315
        %p317 = pneg %p142
        %p318 = pneg %p139
        %p319 = scmp.lt.s32.totalorder %s27, 3
        %s320 = scalar_select %p319, %s27, 3
        %s321 = smul.addr %s320, 8
        %s322 = scalar_lea.vmem %s4, %s321
        %p323 = pneg %p168
        %p324 = pneg %p165
        %p325 = pneg %p189
        %p326 = pneg %p186
        %p327 = pneg %p217
        %p328 = pneg %p214
        %s329 = sand.u32 %s204, 1
        %s330 = scalar_lea.sflag [#allocation4], %s329
        %s331 = sand.u32 %s204, 1
        %s332 = smul.addr %s331, 8
        %s333 = scalar_lea.vmem [#allocation3], %s332
        %p334 = scmp.lt.s32.totalorder %s25, 1
        %s335 = scalar_select %p334, %s25, 1
        %p336 = scmp.lt.s32.totalorder %s26, 0
        %s337 = scalar_select %p336, %s26, 0
        %s338 = sadd.s32 %s337, %s335
        %s339 = smul.addr %s338, 8
        %s340 = scalar_lea.vmem %s0, %s339
        %p341 = scmp.lt.s32.totalorder %s25, 1
        %s342 = scalar_select %p341, %s25, 1
        %p343 = scmp.lt.s32.totalorder %s27, 3
        %s344 = scalar_select %p343, %s27, 3
        %s345 = smul.addr %s342, 4
        %s346 = sadd.s32 %s344, %s345
        %s347 = smul.addr %s346, 8
        %s348 = scalar_lea.vmem %s1, %s347
        %p349 = scmp.lt.s32.totalorder %s27, 3
        %s350 = scalar_select %p349, %s27, 3
        %s351 = smul.addr %s350, 4
        %s352 = smul.addr %s351, 8
        %s353 = scalar_lea.vmem %s2, %s352
        %p354 = scmp.lt.s32.totalorder %s27, 3
        %s355 = scalar_select %p354, %s27, 3
        %s356 = scalar_lea.vmem %s3, %s355
        %p357 = scmp.lt.s32.totalorder %s27, 3
        %s358 = scalar_select %p357, %s27, 3
        %s359 = smul.addr %s358, 8
        %s360 = scalar_lea.vmem %s4, %s359
        %p361 = scmp.eq.s32.totalorder %s27, 0
        // Predicated region
        $region45: #{tpu_custom_call.1} parent=43 // pred_check
          %p362 = pneg %p361
        $region46: #{tpu_custom_call.1} parent=43 // pred_check_branch
          %364 = sbr.rel (%p362) target = $region48
        $region47: #{tpu_custom_call.1} parent=43 // pred_region
          %365 = vst [vmem:[#allocation2] sm:$0xff] 0.0
        $region48: #{tpu_custom_call.1} parent=43 // pred_fallthru
          _
        %v366 = vld [vmem:[%s340] sm:$0xff]
        %v367 = vld [vmem:[%s348] sm:$0xff]
        %v368 = vld [vmem:[%s353] sm:$0xff]
        %v369 = vld [vmem:[%s353 + $0x8] sm:$0xff]
        %v370 = vld [vmem:[%s353 + $0x10] sm:$0xff]
        %v371 = vld [vmem:[%s353 + $0x18] sm:$0xff]
        %v372 = vld [vmem:[%s356] sm:$0x1]
        %v374 = vperm.slane %v372, 0
        %vm376 = vcmask 261120
        %v378 = vsel %vm376, %v366, 0
        %380 = vmatpush.msra.mxu0 0.0
        %381 = vmatpush.msra.mxu0 0.0
        %382 = vmatpush.msra.mxu0 0.0
        %383 = vmatpush.msra.mxu0 0.0
        %384 = vmatpush.msra.mxu0 0.0
        %385 = vmatpush.msra.mxu0 0.0
        %386 = vmatpush.msra.mxu0 0.0
        %387 = vmatpush.msra.mxu0 0.0
        %388 = vmatpush.msra.mxu0 0.0
        %389 = vmatpush.msra.mxu0 0.0
        %390 = vmatpush.msra.mxu0 0.0
        %391 = vmatpush.msra.mxu0 0.0
        %392 = vmatpush.msra.mxu0 %v371
        %393 = vmatpush.msra.mxu0 %v370
        %394 = vmatpush.msra.mxu0 %v369
        %395 = vmatpush.msra.mxu0 %v368
        %396 = vmatmul.f32.gmra.mxu0 %v378
        %v397 = vpop.f32.mrf.mxu0
        %v398 = vadd.f32 %v374, %v397
        %399 = vdwg.mxu0
        %v400 = vmul.f32 %v398, 0.35355338
        %vm401 = vcmask 64512
        %v403 = vsel %vm401, %v400, 0
        %v406 = vsel %vm401, %v367, 0
        %408 = vmatpush.xpose.msra.mxu0 0.0
        %409 = vmatpush.xpose.msra.mxu0 0.0
        %410 = vmatpush.xpose.msra.mxu0 0.0
        %411 = vmatpush.xpose.msra.mxu0 0.0
        %412 = vmatpush.xpose.msra.mxu0 0.0
        %413 = vmatpush.xpose.msra.mxu0 0.0
        %414 = vmatpush.xpose.msra.mxu0 0.0
        %415 = vmatpush.xpose.msra.mxu0 0.0
        %416 = vmatpush.xpose.msra.mxu0 0.0
        %417 = vmatpush.xpose.msra.mxu0 0.0
        %418 = vmatpush.xpose.msra.mxu0 0.0
        %419 = vmatpush.xpose.msra.mxu0 0.0
        %420 = vmatpush.xpose.msra.mxu0 0.0
        %421 = vmatpush.xpose.msra.mxu0 0.0
        %422 = vmatpush.xpose.msra.mxu0 0.0
        %423 = vmatpush.xpose.msra.mxu0 %v406
        %424 = vmatmul.f32.gmra.mxu0 %v403
        %v425 = vpop.f32.mrf.mxu0
        %v426 = vadd.f32 0.0, %v425
        %427 = vdwg.mxu0
        %v428 = vsel %vm401, %v426, -inf
        %429 = vmax.xlane.f32.xlu0 %v428
        %v430 = vpop.xlane.xlu0 %429
        %v431 = vsub.f32 %v426, %v430
        %v432 = vmul.f32 %v431, 1.442695
        %v433 = vpow.pop %v432
        %v434 = vsel %vm401, %v433, 0.0
        %435 = vadd.xlane.f32.xlu0 %v434
        %v436 = vpop.xlane.xlu0 %435
        %v438 = vsel %vm401, %v433, 0
        %440 = vmatpush.msra.mxu0 0.0
        %441 = vmatpush.msra.mxu0 0.0
        %442 = vmatpush.msra.mxu0 0.0
        %443 = vmatpush.msra.mxu0 0.0
        %444 = vmatpush.msra.mxu0 0.0
        %445 = vmatpush.msra.mxu0 0.0
        %446 = vmatpush.msra.mxu0 0.0
        %447 = vmatpush.msra.mxu0 0.0
        %448 = vmatpush.msra.mxu0 0.0
        %449 = vmatpush.msra.mxu0 0.0
        %450 = vmatpush.msra.mxu0 0.0
        %451 = vmatpush.msra.mxu0 0.0
        %452 = vmatpush.msra.mxu0 0.0
        %453 = vmatpush.msra.mxu0 0.0
        %454 = vmatpush.msra.mxu0 0.0
        %455 = vmatpush.msra.mxu0 %v367
        %456 = vmatmul.f32.gmra.mxu0 %v438
        %v457 = vpop.f32.mrf.mxu0
        %v458 = vadd.f32 0.0, %v457
        %459 = vdwg.mxu0
        %v460 = vrcp.pop %v436
        %v461 = vmul.f32 %v458, %v460
        %v462 = vld [vmem:[#allocation2] sm:$0xff]
        %v463 = vld [vmem:[%s360] sm:$0xff]
        %v465 = vsel %vm401, %v461, 0
        %467 = vmatpush.msra.mxu0 0.0
        %468 = vmatpush.msra.mxu0 0.0
        %469 = vmatpush.msra.mxu0 0.0
        %470 = vmatpush.msra.mxu0 0.0
        %471 = vmatpush.msra.mxu0 0.0
        %472 = vmatpush.msra.mxu0 0.0
        %473 = vmatpush.msra.mxu0 0.0
        %474 = vmatpush.msra.mxu0 0.0
        %475 = vmatpush.msra.mxu0 0.0
        %476 = vmatpush.msra.mxu0 0.0
        %477 = vmatpush.msra.mxu0 0.0
        %478 = vmatpush.msra.mxu0 0.0
        %479 = vmatpush.msra.mxu0 0.0
        %480 = vmatpush.msra.mxu0 0.0
        %481 = vmatpush.msra.mxu0 0.0
        %482 = vmatpush.msra.mxu0 %v463
        %483 = vmatmul.f32.gmra.mxu0 %v465
        %v484 = vpop.f32.mrf.mxu0
        %v485 = vadd.f32 0.0, %v484
        %486 = vdwg.mxu0
        %v487 = vadd.f32 %v462, %v485
        %488 = vst [vmem:[#allocation2] sm:$0xff] %v487
        %p489 = scmp.eq.s32.totalorder %s27, 3
        // Predicated region
        $region49: #{tpu_custom_call.1} parent=43 // pred_check
          %p490 = pneg %p489
        $region50: #{tpu_custom_call.1} parent=43 // pred_check_branch
          %492 = sbr.rel (%p490) target = $region52
        $region51: #{tpu_custom_call.1} parent=43 // pred_region
          %v493 = vld [vmem:[#allocation2] sm:$0xff]
          %v494 = vld [vmem:[%s5] sm:$0x1]
          %v496 = vperm.slane %v494, 0
          %v498 = vadd.f32 %v493, %v496
          %499 = vst [vmem:[%s333] sm:$0xff] %v498
        $region52: #{tpu_custom_call.1} parent=43 // pred_fallthru
          _
        %s500 = sand.u32 %s204, 1
        %s501 = scalar_lea.sflag [#allocation4], %s500
        %s502 = sand.u32 %s204, 1
        %s503 = smul.addr %s502, 8
        %s504 = scalar_lea.vmem [#allocation3], %s503
        // Predicated region
        $region53: #{tpu_custom_call.1} parent=43 // pred_check
          %p505 = pneg %p214
        $region54: #{tpu_custom_call.1} parent=43 // pred_check_branch
          %507 = sbr.rel (%p505) target = $region56
        $region55: #{tpu_custom_call.1} parent=43 // pred_region
          %509 = vsyncadd %s501, 0
          %s510 = sadd.s32 %s26, %s25
          %s511 = smul.addr %s510, 8
          %s512 = scalar_lea.hbm %s6, %s511
          %s514 = sshll.u32 %s504, 4
          %s515 = int_to_ptr.vmem [resolvable:$true] %s514
          %s516 = sshll.u32 %s512, 4
          %s517 = int_to_ptr.hbm [resolvable:$true] %s516
          %519 = dma.vmem_to_hbm [thread:$0]  %s515, 128, %s517, %s501
        $region56: #{tpu_custom_call.1} parent=43 // pred_fallthru
          _
      $region44: #{tpu_custom_call.1} parent=5 // pred_fallthru
        _
      %p520 = scmp.le.s32.totalorder 2, %s15
      // Predicated region
      $region57: #{tpu_custom_call.1} parent=5 // pred_check
        %p521 = pneg %p520
      $region58: #{tpu_custom_call.1} parent=5 // pred_check_branch
        %523 = sbr.rel (%p521) target = $region60
      $region59: #{tpu_custom_call.1} parent=5 // pred_region
        %s524 = ssub.s32 %s15, 2
        // Predicated region
        $region61: #{tpu_custom_call.1} parent=59 // pred_check
          %p525 = pneg %p220
        $region62: #{tpu_custom_call.1} parent=59 // pred_check_branch
          %527 = sbr.rel (%p525) target = $region64
        $region63: #{tpu_custom_call.1} parent=59 // pred_region
          %s528 = sand.u32 %s205, 1
          %s529 = scalar_lea.sflag [#allocation4], %s528
          %s530 = sand.u32 %s205, 1
          %s531 = smul.addr %s530, 8
          %s532 = scalar_lea.vmem [#allocation3], %s531
          %534 = dma.done %s529, 128
        $region64: #{tpu_custom_call.1} parent=59 // pred_fallthru
          _
      $region60: #{tpu_custom_call.1} parent=5 // pred_fallthru
        _
    $region6: #{tpu_custom_call.1} parent=1 // loop_footer
      %s19 = sadd.s32 1, %s15
    $region7: #{tpu_custom_call.1} parent=1 // loop_footer_branch
      %14 = sbr.rel target = $region3
    $region8: #{tpu_custom_call.1} parent=1 // loop_exit
      _
    %535 = vsyncpa [#allocation4], 1
    %s536 = scalar_lea.sflag [#allocation4], 1
    %537 = vsyncpa %s536, 1

</llo_original>
